<compile_context>
chip_gen: v5e
topology: v5e:2x2
jax: 0.10.0
libtpu: 0.0.40
codegen_flags: <defaults>
</compile_context>

<pallas_src>
import jax
import jax.numpy as jnp
from jax.experimental import pallas as pl
from jax.experimental.pallas import tpu as pltpu

K = 7          # conv kernel size
PAD = 3        # conv padding
KK = K * K


def _pick_spatial_tile(s, itemsize, block_bytes):
    """Full S unless S is 128-divisible and too big for the budget, in which case
    the largest 128-multiple divisor of S such that an (8, ts) block fits."""
    if s % 128 != 0:
        return s
    cap = max(128, ((block_bytes // (8 * itemsize)) // 128) * 128)
    if s <= cap:
        return s
    best = 128
    t = 256
    while t <= cap:
        if s % t == 0:
            best = t
        t += 128
    return best


def _pick_channel_tile(c, ts, itemsize, block_bytes):
    """Full C if it fits the per-step budget, else a multiple of 8 (or C itself)."""
    cap = max(1, block_bytes // (ts * itemsize))
    if c <= cap:
        return c
    return min(max(8, (cap // 8) * 8), c)


def _reduce_kernel_factory(c, tc, inv_c, mask_last):
    """Channel sum/max over (1, tc, ts) blocks, accumulated into the output block."""

    def kernel(x_ref, o_ref):
        ci = pl.program_id(2)

        xb = x_ref[0].astype(jnp.float32)                    # (tc, ts), f32 accumulation
        if mask_last:
            # Ceiling-divided C axis: mask garbage rows of the partial last tile.
            rows_left = c - ci * tc
            row_ids = jax.lax.broadcasted_iota(jnp.int32, (tc, 1), 0)
            valid = row_ids < rows_left
            x_sum = jnp.where(valid, xb, 0.0)
            x_max = jnp.where(valid, xb, -jnp.inf)
        else:
            x_sum = xb
            x_max = xb

        # Both reductions consume the same loaded block (single VMEM read of xb).
        part_sum = jnp.sum(x_sum, axis=0, keepdims=True)     # (1, ts)
        part_max = jnp.max(x_max, axis=0, keepdims=True)     # (1, ts)

        @pl.when(ci == 0)
        def _init():
            o_ref[0, 0] = part_sum
            o_ref[0, 1] = part_max

        @pl.when(ci > 0)
        def _accumulate():
            o_ref[0, 0] = o_ref[0, 0] + part_sum
            o_ref[0, 1] = jnp.maximum(o_ref[0, 1], part_max)

        @pl.when(ci == pl.num_programs(2) - 1)
        def _finalize():
            o_ref[0, 0] = o_ref[0, 0] * inv_c                # sum -> mean

    return kernel


def _conv_kernel_factory(h, w):
    """7x7 conv (2 -> 1, pad 3, no bias) + sigmoid over the reduced (avg, max) maps."""
    hp, wp = h + 2 * PAD, w + 2 * PAD

    def kernel(w_ref, y_ref, o_ref, pad_avg, pad_max):
        # Zero only the 3-wide border strips; the interior is always overwritten.
        # (Done every step so megacore partitioning of the batch axis stays safe.)
        zrow = jnp.zeros((PAD, wp), jnp.float32)
        zcol = jnp.zeros((hp, PAD), jnp.float32)
        for pref in (pad_avg, pad_max):
            pref[0:PAD, :] = zrow
            pref[hp - PAD:hp, :] = zrow
            pref[:, 0:PAD] = zcol
            pref[:, wp - PAD:wp] = zcol
        pad_avg[PAD:PAD + h, PAD:PAD + w] = y_ref[0, 0]
        pad_max[PAD:PAD + h, PAD:PAD + w] = y_ref[0, 1]

        avg_p = pad_avg[...]                                  # (Hp, Wp)
        max_p = pad_max[...]

        # Hoist all 98 weight scalars (SMEM reads) out of the unrolled loop.
        wa = [w_ref[i] for i in range(KK)]
        wm = [w_ref[KK + i] for i in range(KK)]

        # Hoist the 7 lane-direction shifted views of each map out of the kh loop.
        avg_cols = [avg_p[:, kw:kw + w] for kw in range(K)]   # each (Hp, W)
        max_cols = [max_p[:, kw:kw + w] for kw in range(K)]

        # TODO(synk): for very large H, W tile this conv over output-row bands to
        # bound the live (Hp, W) temporaries and consider pltpu.roll-based shifts.
        acc = jnp.zeros((h, w), jnp.float32)
        for kh in range(K):
            g = wa[kh * K] * avg_cols[0] + wm[kh * K] * max_cols[0]
            for kw in range(1, K):
                g = g + wa[kh * K + kw] * avg_cols[kw] \
                      + wm[kh * K + kw] * max_cols[kw]
            # only a cheap sublane-contiguous slice inside the kh loop
            acc = acc + g[kh:kh + h, :]

        o_ref[0, 0] = jax.nn.sigmoid(acc).astype(o_ref.dtype)

    return kernel


def standard_spatial_attention(x, conv_weight, *, c_tile=None,
                               block_bytes=4 * 1024 * 1024):
    """x: (B, C, H, W) float. conv_weight: (1, 2, 7, 7) float.
    Returns sigmoid(conv2d(cat([mean_c(x), max_c(x)]))) of shape (B, 1, H, W), f32."""
    b, c, h, w = x.shape
    s = h * w
    itemsize = x.dtype.itemsize

    ts = _pick_spatial_tile(s, itemsize, block_bytes)
    ns = s // ts
    if c_tile is None:
        tc = _pick_channel_tile(c, ts, itemsize, block_bytes)
    else:
        tc = int(c_tile)
        assert 0 < tc <= c and (tc == c or tc % 8 == 0), \
            "c_tile must equal C or be a multiple of 8"
    nc = -(-c // tc)                       # ceiling division: no divisor requirement on C
    mask_last = (c % tc) != 0
    inv_c = 1.0 / c

    x_flat = x.reshape(b, c, s)            # free: NCHW is contiguous over (H, W)

    in_block = tc * ts * itemsize
    out_block = 2 * ts * 4
    vmem_limit = int(max(2 * in_block + 2 * out_block + (2 << 20), 16 << 20))

    # ---- pass 1: lane-dense channel mean/max reduction (the hot, HBM-bound pass) ----
    maps = pl.pallas_call(
        _reduce_kernel_factory(c, tc, inv_c, mask_last),
        out_shape=jax.ShapeDtypeStruct((b, 2, 1, s), jnp.float32),
        grid=(b, ns, nc),
        in_specs=[pl.BlockSpec((1, tc, ts), lambda bi, si, ci: (bi, ci, si))],
        out_specs=pl.BlockSpec((1, 2, 1, ts), lambda bi, si, ci: (bi, 0, 0, si)),
        compiler_params=pltpu.CompilerParams(
            dimension_semantics=("parallel", "parallel", "arbitrary"),
            vmem_limit_bytes=vmem_limit),
    )(x_flat)

    maps4 = maps.reshape(b, 2, h, w)       # free reshape of the tiny reduced maps
    # Flattened weights: [0:49] -> avg-channel taps, [49:98] -> max-channel taps.
    w_flat = conv_weight.astype(jnp.float32).reshape(-1)

    # ---- pass 2: tiny 7x7 conv + sigmoid over the (B, 2, H, W) reduced maps ----
    out = pl.pallas_call(
        _conv_kernel_factory(h, w),
        out_shape=jax.ShapeDtypeStruct((b, 1, h, w), jnp.float32),
        grid=(b,),
        in_specs=[
            pl.BlockSpec(memory_space=pltpu.SMEM),                   # conv weights
            pl.BlockSpec((1, 2, h, w), lambda bi: (bi, 0, 0, 0)),    # reduced maps
        ],
        out_specs=pl.BlockSpec((1, 1, h, w), lambda bi: (bi, 0, 0, 0)),
        scratch_shapes=[
            pltpu.VMEM((h + 2 * PAD, w + 2 * PAD), jnp.float32),     # zero-padded avg
            pltpu.VMEM((h + 2 * PAD, w + 2 * PAD), jnp.float32),     # zero-padded max
        ],
        compiler_params=pltpu.CompilerParams(dimension_semantics=("parallel",)),
    )(w_flat, maps4)

    return out


def _reference(x, conv_weight):
    """Pure-JAX reference mirroring the PyTorch forward."""
    avg_out = jnp.mean(x, axis=1, keepdims=True)
    max_out = jnp.max(x, axis=1, keepdims=True)
    y = jnp.concatenate([avg_out, max_out], axis=1)          # (B, 2, H, W)
    y = jax.lax.conv_general_dilated(
        y, conv_weight,
        window_strides=(1, 1), padding=((PAD, PAD), (PAD, PAD)),
        dimension_numbers=("NCHW", "OIHW", "NCHW"))
    return jax.nn.sigmoid(y)


if __name__ == "__main__":
    key = jax.random.PRNGKey(0)
    kx, kx2, kw_key = jax.random.split(key, 3)

    B, C, H, W = 2, 4, 16, 16
    x = jax.random.normal(kx, (B, C, H, W), dtype=jnp.float32)
    conv_weight = 0.1 * jax.random.normal(kw_key, (1, 2, K, K), dtype=jnp.float32)

    # Default tiling (single channel step per (batch, spatial tile)).
    out1 = jax.block_until_ready(standard_spatial_attention(x, conv_weight))
    ref1 = _reference(x, conv_weight)
    assert out1.shape == (B, 1, H, W)
    assert jnp.allclose(out1, ref1, atol=1e-5, rtol=1e-5), "mismatch (single C step)"

    # Exercise the multi-step channel reduction with a masked partial last tile
    # (C = 12, tc = 8 -> nc = 2, last tile has only 4 valid channels), B = 1.
    x2 = jax.random.normal(kx2, (1, 12, H, W), dtype=jnp.float32)
    out2 = jax.block_until_ready(standard_spatial_attention(x2, conv_weight, c_tile=8))
    ref2 = _reference(x2, conv_weight)
    assert out2.shape == (1, 1, H, W)
    assert jnp.allclose(out2, ref2, atol=1e-5, rtol=1e-5), "mismatch (masked C tiles)"

    print("KERNEL_OK")
</pallas_src>

<mosaic_0001>
module attributes {stable_mosaic.version = 11 : i64} {
  func.func @kernel(%arg0: i32, %arg1: i32, %arg2: i32, %arg3: memref<1x4x256xf32, #tpu.memory_space<vmem>>, %arg4: memref<1x2x1x256xf32, #tpu.memory_space<vmem>>) attributes {dimension_semantics = [#tpu.dimension_semantics<parallel>, #tpu.dimension_semantics<parallel>, #tpu.dimension_semantics<arbitrary>], iteration_bounds = array<i64: 2, 1, 1>, scalar_prefetch = 0 : i64, scratch_operands = 0 : i64, tpu.core_type = #tpu.core_type<tc>, window_params = [{transform_indices = @transform_0, window_bounds = array<i64: 1, 4, 256>}, {transform_indices = @transform_1, window_bounds = array<i64: 1, 2, 1, 256>}]} {
    %c0 = arith.constant 0 : index
    %c0_0 = arith.constant 0 : index
    %c0_1 = arith.constant 0 : index
    %0 = vector.load %arg3[%c0, %c0_0, %c0_1] : memref<1x4x256xf32, #tpu.memory_space<vmem>>, vector<1x4x256xf32>
    %1 = vector.shape_cast %0 : vector<1x4x256xf32> to vector<4x256xf32>
    %cst = arith.constant dense<0.000000e+00> : vector<256xf32>
    %2 = vector.multi_reduction <add>, %1, %cst [0] : vector<4x256xf32> to vector<256xf32>
    %3 = vector.shape_cast %2 : vector<256xf32> to vector<1x256xf32>
    %cst_2 = arith.constant dense<0xFF800000> : vector<256xf32>
    %4 = vector.multi_reduction <maximumf>, %1, %cst_2 [0] : vector<4x256xf32> to vector<256xf32>
    %5 = vector.shape_cast %4 : vector<256xf32> to vector<1x256xf32>
    %c0_i32 = arith.constant 0 : i32
    %6 = arith.cmpi eq, %arg2, %c0_i32 : i32
    %7 = arith.extui %6 : i1 to i32
    %c0_i32_3 = arith.constant 0 : i32
    %8 = arith.cmpi ne, %7, %c0_i32_3 : i32
    scf.if %8 {
      %c0_8 = arith.constant 0 : index
      %c0_9 = arith.constant 0 : index
      %c0_10 = arith.constant 0 : index
      %c0_11 = arith.constant 0 : index
      %15 = vector.load %arg4[%c0_8, %c0_9, %c0_10, %c0_11] : memref<1x2x1x256xf32, #tpu.memory_space<vmem>>, vector<1x1x1x256xf32>
      %16 = vector.shape_cast %15 : vector<1x1x1x256xf32> to vector<1x256xf32>
      %17 = vector.shape_cast %3 : vector<1x256xf32> to vector<1x1x1x256xf32>
      tpu.vector_store %arg4[%c0_8, %c0_9, %c0_10, %c0_11], %17 {strides = array<i32>} : memref<1x2x1x256xf32, #tpu.memory_space<vmem>>, vector<1x1x1x256xf32>,
      %c0_12 = arith.constant 0 : index
      %c1 = arith.constant 1 : index
      %c0_13 = arith.constant 0 : index
      %c0_14 = arith.constant 0 : index
      %18 = vector.load %arg4[%c0_12, %c1, %c0_13, %c0_14] : memref<1x2x1x256xf32, #tpu.memory_space<vmem>>, vector<1x1x1x256xf32>
      %19 = vector.shape_cast %18 : vector<1x1x1x256xf32> to vector<1x256xf32>
      %20 = vector.shape_cast %5 : vector<1x256xf32> to vector<1x1x1x256xf32>
      tpu.vector_store %arg4[%c0_12, %c1, %c0_13, %c0_14], %20 {strides = array<i32>} : memref<1x2x1x256xf32, #tpu.memory_space<vmem>>, vector<1x1x1x256xf32>,
    } else {
    }
    %c0_i32_4 = arith.constant 0 : i32
    %9 = arith.cmpi sgt, %arg2, %c0_i32_4 : i32
    %10 = arith.extui %9 : i1 to i32
    %c0_i32_5 = arith.constant 0 : i32
    %11 = arith.cmpi ne, %10, %c0_i32_5 : i32
    scf.if %11 {
      %c0_8 = arith.constant 0 : index
      %c0_9 = arith.constant 0 : index
      %c0_10 = arith.constant 0 : index
      %c0_11 = arith.constant 0 : index
      %15 = vector.load %arg4[%c0_8, %c0_9, %c0_10, %c0_11] : memref<1x2x1x256xf32, #tpu.memory_space<vmem>>, vector<1x1x1x256xf32>
      %16 = vector.shape_cast %15 : vector<1x1x1x256xf32> to vector<1x256xf32>
      %17 = arith.addf %16, %3 : vector<1x256xf32>
      %c0_12 = arith.constant 0 : index
      %c0_13 = arith.constant 0 : index
      %c0_14 = arith.constant 0 : index
      %c0_15 = arith.constant 0 : index
      %18 = vector.load %arg4[%c0_12, %c0_13, %c0_14, %c0_15] : memref<1x2x1x256xf32, #tpu.memory_space<vmem>>, vector<1x1x1x256xf32>
      %19 = vector.shape_cast %18 : vector<1x1x1x256xf32> to vector<1x256xf32>
      %20 = vector.shape_cast %17 : vector<1x256xf32> to vector<1x1x1x256xf32>
      tpu.vector_store %arg4[%c0_12, %c0_13, %c0_14, %c0_15], %20 {strides = array<i32>} : memref<1x2x1x256xf32, #tpu.memory_space<vmem>>, vector<1x1x1x256xf32>,
      %c0_16 = arith.constant 0 : index
      %c1 = arith.constant 1 : index
      %c0_17 = arith.constant 0 : index
      %c0_18 = arith.constant 0 : index
      %21 = vector.load %arg4[%c0_16, %c1, %c0_17, %c0_18] : memref<1x2x1x256xf32, #tpu.memory_space<vmem>>, vector<1x1x1x256xf32>
      %22 = vector.shape_cast %21 : vector<1x1x1x256xf32> to vector<1x256xf32>
      %23 = arith.maximumf %22, %5 : vector<1x256xf32>
      %c0_19 = arith.constant 0 : index
      %c1_20 = arith.constant 1 : index
      %c0_21 = arith.constant 0 : index
      %c0_22 = arith.constant 0 : index
      %24 = vector.load %arg4[%c0_19, %c1_20, %c0_21, %c0_22] : memref<1x2x1x256xf32, #tpu.memory_space<vmem>>, vector<1x1x1x256xf32>
      %25 = vector.shape_cast %24 : vector<1x1x1x256xf32> to vector<1x256xf32>
      %26 = vector.shape_cast %23 : vector<1x256xf32> to vector<1x1x1x256xf32>
      tpu.vector_store %arg4[%c0_19, %c1_20, %c0_21, %c0_22], %26 {strides = array<i32>} : memref<1x2x1x256xf32, #tpu.memory_space<vmem>>, vector<1x1x1x256xf32>,
    } else {
    }
    %c0_i32_6 = arith.constant 0 : i32
    %12 = arith.cmpi eq, %arg2, %c0_i32_6 : i32
    %13 = arith.extui %12 : i1 to i32
    %c0_i32_7 = arith.constant 0 : i32
    %14 = arith.cmpi ne, %13, %c0_i32_7 : i32
    scf.if %14 {
      %c0_8 = arith.constant 0 : index
      %c0_9 = arith.constant 0 : index
      %c0_10 = arith.constant 0 : index
      %c0_11 = arith.constant 0 : index
      %15 = vector.load %arg4[%c0_8, %c0_9, %c0_10, %c0_11] : memref<1x2x1x256xf32, #tpu.memory_space<vmem>>, vector<1x1x1x256xf32>
      %16 = vector.shape_cast %15 : vector<1x1x1x256xf32> to vector<1x256xf32>
      %cst_12 = arith.constant 2.500000e-01 : f32
      %17 = vector.broadcast %cst_12 : f32 to vector<1x256xf32>
      %18 = arith.mulf %16, %17 : vector<1x256xf32>
      %c0_13 = arith.constant 0 : index
      %c0_14 = arith.constant 0 : index
      %c0_15 = arith.constant 0 : index
      %c0_16 = arith.constant 0 : index
      %19 = vector.load %arg4[%c0_13, %c0_14, %c0_15, %c0_16] : memref<1x2x1x256xf32, #tpu.memory_space<vmem>>, vector<1x1x1x256xf32>
      %20 = vector.shape_cast %19 : vector<1x1x1x256xf32> to vector<1x256xf32>
      %21 = vector.shape_cast %18 : vector<1x256xf32> to vector<1x1x1x256xf32>
      tpu.vector_store %arg4[%c0_13, %c0_14, %c0_15, %c0_16], %21 {strides = array<i32>} : memref<1x2x1x256xf32, #tpu.memory_space<vmem>>, vector<1x1x1x256xf32>,
    } else {
    }
    return
  }
  func.func @transform_0(%arg0: i32, %arg1: i32, %arg2: i32) -> (i32, i32, i32) {
    %c0_i32 = arith.constant 0 : i32
    return %arg0, %arg2, %arg1 : i32, i32, i32
  }
  func.func @transform_1(%arg0: i32, %arg1: i32, %arg2: i32) -> (i32, i32, i32, i32) {
    %c0_i32 = arith.constant 0 : i32
    %c0_i32_0 = arith.constant 0 : i32
    %c0_i32_1 = arith.constant 0 : i32
    return %arg0, %c0_i32, %c0_i32_0, %arg1 : i32, i32, i32, i32
  }
}

</mosaic_0001>

<llo_original>
// kernel: tpu_custom_call.1
$region0: #{tpu_custom_call.1}
  #allocation0 [shape = 'u32[]', space=smem, size = 0x4, offset = 0x4, fixed_abs, tag = 'smem constant byte address 0x4 - core index']
  #allocation1 [shape = 'u32[72,128]{1,0:T(1,128)}', space=vmem, size = 0x9000, scoped, tag = 'internal scratch']
  %s0 = inlined_call_operand.hbm [shape: f32[2,4,256], index: 0, kind: input, shape index: {}]
  %s1 = inlined_call_operand.hbm [shape: f32[2,2,1,256], index: 1, kind: output, shape index: {}]
  %s2 = sld [smem:[#allocation0]]
  $region53: #{tpu_custom_call.1} parent=0
    _
  %s4 = ssub.s32 1, %s2
  %s5 = scalar_select 0, %s4, %s2
  $region1: #{tpu_custom_call.1} parent=0
    #allocation2 [shape = 'u8[8192]{0}', space=vmem, size = 0x2000, scoped, tag = 'input window, operand 0']
    #allocation3 [shape = 's32[2]{0}', space=sflag, size = 0x8, scoped, tag = 'scoped memory for tpu_custom_call.1']
    #allocation4 [shape = 's32[2]{0}', space=sflag, size = 0x8, scoped, tag = 'scoped memory for tpu_custom_call.1']
    #allocation5 [shape = 'u8[4096]{0}', space=vmem, size = 0x1000, scoped, tag = 'output window, operand 0']
    %6 = vsyncpa [#allocation3], 0
    %s7 = scalar_lea.sflag [#allocation3], 1
    %8 = vsyncpa %s7, 0
    %9 = vsyncpa [#allocation4], 0
    %s10 = scalar_lea.sflag [#allocation4], 1
    %11 = vsyncpa %s10, 0
    loop: start=0, step=1, limit=4
    $region2: #{tpu_custom_call.1} parent=1 // loop_pre_header
      _
    $region3: #{tpu_custom_call.1} parent=1 // loop_header
      %s13 = sphi 0, %s17
      %p14 = scmp.ge.s32.totalorder %s13, 4
      %s20 = sphi 0, %s39
      %s21 = sphi 0, %s35
      %s22 = sphi 0, %s31
      %s23 = sphi 0, %s20
      %s24 = sphi 0, %s21
      %s25 = sphi 0, %s22
      %s26 = sphi 0, %s23
      %s27 = sphi 0, %s24
      %s28 = sphi 0, %s25
      %s46 = sphi 0, %s48
      %s49 = sphi 0, %s46
      %s50 = sphi 0, %s49
      %s66 = sphi 0, %s50
      %s74 = sphi 0, %s76
      %s77 = sphi 0, %s74
      %s78 = sphi 0, %s77
      %s94 = sphi 0, %s78
    $region4: #{tpu_custom_call.1} parent=1 // loop_header_branch
      %16 = sbr.rel (%p14) target = $region8
    $region5: #{tpu_custom_call.1} parent=1 // loop_body
      %s18 = ssub.s32 %s13, 1
      %s19 = ssub.s32 %s13, 2
      %s29 = sadd.s32 1, %s22
      %p30 = scmp.ge.s32.totalorder %s29, 1
      %s31 = scalar_select %p30, 0, %s29
      %s32 = sadd.s32 1, %s21
      %s33 = scalar_select %p30, %s32, %s21
      %p34 = scmp.ge.s32.totalorder %s33, 1
      %s35 = scalar_select %p34, 0, %s33
      %s36 = sadd.s32 1, %s20
      %s37 = scalar_select %p34, %s36, %s20
      %p38 = scmp.ge.s32.totalorder %s37, 2
      %s39 = scalar_select %p38, 0, %s37
      %s40 = ssub.s32 %s20, %s39
      %s41 = ssub.s32 %s22, %s31
      %s42 = sor.u32 %s40, %s41
      %s43 = ssub.s32 %s21, %s35
      %s44 = sor.u32 %s42, %s43
      %p45 = scmp.eq.s32.totalorder %s44, 0
      %s47 = sadd.s32 %s46, 1
      %s48 = scalar_select %p45, %s46, %s47
      %p51 = pneg %p45
      %p52 = scmp.eq.s32.totalorder %s13, 1
      %p53 = por %p51, %p52
      %p54 = scmp.ne.s32.totalorder %s46, %s49
      %p55 = scmp.eq.s32.totalorder %s13, 0
      %p56 = por %p54, %p55
      %p57 = scmp.ne.s32.totalorder %s46, %s49
      %p58 = scmp.eq.s32.totalorder %s18, 1
      %p59 = por %p57, %p58
      %p60 = scmp.ne.s32.totalorder %s49, %s50
      %p61 = scmp.eq.s32.totalorder %s18, 0
      %p62 = por %p60, %p61
      %p63 = scmp.ne.s32.totalorder %s49, %s50
      %p64 = scmp.eq.s32.totalorder %s19, 1
      %p65 = por %p63, %p64
      %p67 = scmp.ne.s32.totalorder %s50, %s66
      %p68 = scmp.eq.s32.totalorder %s19, 0
      %p69 = por %p67, %p68
      %s70 = ssub.s32 %s20, %s39
      %s71 = ssub.s32 %s21, %s35
      %s72 = sor.u32 %s70, %s71
      %p73 = scmp.eq.s32.totalorder %s72, 0
      %s75 = sadd.s32 %s74, 1
      %s76 = scalar_select %p73, %s74, %s75
      %p79 = pneg %p73
      %p80 = scmp.eq.s32.totalorder %s13, 1
      %p81 = por %p79, %p80
      %p82 = scmp.ne.s32.totalorder %s74, %s77
      %p83 = scmp.eq.s32.totalorder %s13, 0
      %p84 = por %p82, %p83
      %p85 = scmp.ne.s32.totalorder %s74, %s77
      %p86 = scmp.eq.s32.totalorder %s18, 1
      %p87 = por %p85, %p86
      %p88 = scmp.ne.s32.totalorder %s77, %s78
      %p89 = scmp.eq.s32.totalorder %s18, 0
      %p90 = por %p88, %p89
      %p91 = scmp.ne.s32.totalorder %s77, %s78
      %p92 = scmp.eq.s32.totalorder %s19, 1
      %p93 = por %p91, %p92
      %p95 = scmp.ne.s32.totalorder %s78, %s94
      %p96 = scmp.eq.s32.totalorder %s19, 0
      %p97 = por %p95, %p96
      %p98 = scmp.le.s32.totalorder 1, %s13
      %p99 = scmp.lt.s32.totalorder %s13, 3
      %p100 = pnand %p98, %p99
      %p101 = pneg %p100
      // Predicated region
      $region9: #{tpu_custom_call.1} parent=5 // pred_check
        _
      $region10: #{tpu_custom_call.1} parent=5 // pred_check_branch
        %103 = sbr.rel (%p100) target = $region12
      $region11: #{tpu_custom_call.1} parent=5 // pred_region
        %s104 = ssub.s32 %s13, 1
      $region12: #{tpu_custom_call.1} parent=5 // pred_fallthru
        _
      %p105 = scmp.lt.s32.totalorder %s13, 2
      // Predicated region
      $region13: #{tpu_custom_call.1} parent=5 // pred_check
        %p106 = pneg %p105
      $region14: #{tpu_custom_call.1} parent=5 // pred_check_branch
        %108 = sbr.rel (%p106) target = $region16
      $region15: #{tpu_custom_call.1} parent=5 // pred_region
        // Predicated region
        $region17: #{tpu_custom_call.1} parent=15 // pred_check
          %p109 = pneg %p56
        $region18: #{tpu_custom_call.1} parent=15 // pred_check_branch
          %111 = sbr.rel (%p109) target = $region20
        $region19: #{tpu_custom_call.1} parent=15 // pred_region
          %s112 = sand.u32 %s46, 1
          %s113 = scalar_lea.sflag [#allocation3], %s112
          %s114 = sand.u32 %s46, 1
          %s115 = smul.addr %s114, 8
          %s116 = scalar_lea.vmem [#allocation2], %s115
          %s117 = smul.u32 2, %s21
          %119 = vsyncadd %s113, 0
          %s120 = smul.addr %s22, 2
          %s121 = sadd.s32 %s117, %s120
          %s122 = smul.addr %s20, 2
          %s123 = sadd.s32 %s121, %s122
          %s124 = smul.addr %s123, 4
          %s125 = scalar_lea.hbm %s0, %s124
          %s127 = sshll.u32 %s125, 4
          %s128 = int_to_ptr.hbm [resolvable:$true] %s127
          %s129 = sshll.u32 %s116, 4
          %s130 = int_to_ptr.vmem [resolvable:$true] %s129
          %132 = dma.hbm_to_vmem [thread:$0]  %s128, 128, %s130, %s113
        $region20: #{tpu_custom_call.1} parent=15 // pred_fallthru
          _
      $region16: #{tpu_custom_call.1} parent=5 // pred_fallthru
        _
      %p133 = scmp.le.s32.totalorder 1, %s13
      %p134 = scmp.lt.s32.totalorder %s13, 3
      %p135 = pnand %p133, %p134
      %p136 = pneg %p135
      // Predicated region
      $region21: #{tpu_custom_call.1} parent=5 // pred_check
        _
      $region22: #{tpu_custom_call.1} parent=5 // pred_check_branch
        %138 = sbr.rel (%p135) target = $region24
      $region23: #{tpu_custom_call.1} parent=5 // pred_region
        %s139 = ssub.s32 %s13, 1
        %s140 = sand.u32 %s49, 1
        %s141 = scalar_lea.sflag [#allocation3], %s140
        %s142 = sand.u32 %s49, 1
        %s143 = smul.addr %s142, 8
        %s144 = scalar_lea.vmem [#allocation2], %s143
        // Predicated region
        $region25: #{tpu_custom_call.1} parent=23 // pred_check
          %p145 = pneg %p62
        $region26: #{tpu_custom_call.1} parent=23 // pred_check_branch
          %147 = sbr.rel (%p145) target = $region28
        $region27: #{tpu_custom_call.1} parent=23 // pred_region
          %149 = dma.done %s141, 128
        $region28: #{tpu_custom_call.1} parent=23 // pred_fallthru
          _
        %s150 = sand.u32 %s49, 1
        %s151 = scalar_lea.sflag [#allocation3], %s150
        %s152 = sand.u32 %s49, 1
        %s153 = smul.addr %s152, 8
        %s154 = scalar_lea.vmem [#allocation2], %s153
        %p155 = pneg %p62
        %p156 = pneg %p59
        %p157 = pneg %p90
        %p158 = pneg %p87
        %s159 = sand.u32 %s77, 1
        %s160 = scalar_lea.sflag [#allocation4], %s159
        %s161 = sand.u32 %s77, 1
        %s162 = smul.addr %s161, 4
        %s163 = scalar_lea.vmem [#allocation5], %s162
        %s164 = smul.u32 2, %s24
        %s165 = smul.u32 2, %s24
        %v166 = vld [vmem:[%s144] sm:$0xff]
        %168 = vst [vmem:[#allocation1] ss:$2 sm:$0xff] %v166
        %v169 = vld.sshfl [vmem:[#allocation1] sm:$0xff pattern:$0x75316420]
        %v170 = vld.sshfl [vmem:[#allocation1 + $0x8] sm:$0xff pattern:$0x75316420]
        %vm173 = vcmask 1043456
        %v174 = vsel %vm173, %v169, 0.0
        %v175 = vrot.slane %v174, 4
        %v176 = vadd.f32 %v174, %v175
        %v177 = vrot.slane %v176, 2
        %v178 = vadd.f32 %v176, %v177
        %v179 = vrot.slane %v178, 1
        %v180 = vadd.f32 %v178, %v179
        %v181 = vsel %vm173, %v170, 0.0
        %v182 = vrot.slane %v181, 4
        %v183 = vadd.f32 %v181, %v182
        %v184 = vrot.slane %v183, 2
        %v185 = vadd.f32 %v183, %v184
        %v186 = vrot.slane %v185, 1
        %v187 = vadd.f32 %v185, %v186
        %188 = vst [vmem:[#allocation1] ss:$2 sm:$0xff] %v166
        %v189 = vld.sshfl [vmem:[#allocation1] sm:$0xff pattern:$0x75316420]
        %v190 = vld.sshfl [vmem:[#allocation1 + $0x8] sm:$0xff pattern:$0x75316420]
        %v193 = vsel %vm173, %v189, -inf
        %v194 = vrot.slane %v193, 4
        %v195 = vmax.f32 %v193, %v194
        %v196 = vrot.slane %v195, 2
        %v197 = vmax.f32 %v195, %v196
        %v198 = vrot.slane %v197, 1
        %v199 = vmax.f32 %v197, %v198
        %v200 = vsel %vm173, %v190, -inf
        %v201 = vrot.slane %v200, 4
        %v202 = vmax.f32 %v200, %v201
        %v203 = vrot.slane %v202, 2
        %v204 = vmax.f32 %v202, %v203
        %v205 = vrot.slane %v204, 1
        %v206 = vmax.f32 %v204, %v205
        %p207 = scmp.eq.s32.totalorder %s25, 0
        // Predicated region
        $region29: #{tpu_custom_call.1} parent=23 // pred_check
          %p208 = pneg %p207
        $region30: #{tpu_custom_call.1} parent=23 // pred_check_branch
          %210 = sbr.rel (%p208) target = $region32
        $region31: #{tpu_custom_call.1} parent=23 // pred_region
          %v213 = vrot.slane %v187, 7
          %vm214 = vcmask 1040384
          %v215 = vsel %vm214, %v180, %v213
          %v217 = vlaneseq
          %vm218 = vcmp.ge.s32.totalorder %v217, 0
          %vm219 = vcmp.lt.s32.totalorder %v217, 256
          %vm220 = vmand %vm218, %vm219
          %221 = vst.msk [vmem:[%s163] sm:$0x3] %vm220, %v215
          %v224 = vrot.slane %v206, 7
          %v225 = vsel %vm214, %v199, %v224
          %s227 = scalar_lea.vmem %s163, 2 [#allocation5]
          %228 = vst.msk [vmem:[%s227] sm:$0x3] %vm220, %v225
        $region32: #{tpu_custom_call.1} parent=23 // pred_fallthru
          _
        %p229 = scmp.gt.s32.totalorder %s25, 0
        // Predicated region
        $region33: #{tpu_custom_call.1} parent=23 // pred_check
          %p230 = pneg %p229
        $region34: #{tpu_custom_call.1} parent=23 // pred_check_branch
          %232 = sbr.rel (%p230) target = $region36
        $region35: #{tpu_custom_call.1} parent=23 // pred_region
          %v233 = vld [vmem:[%s163] sm:$0x3]
          %v236 = vrot.slane %v187, 7
          %vm237 = vcmask 1040384
          %v238 = vsel %vm237, %v180, %v236
          %v240 = vadd.f32 %v233, %v238
          %v241 = vlaneseq
          %vm242 = vcmp.ge.s32.totalorder %v241, 0
          %vm243 = vcmp.lt.s32.totalorder %v241, 256
          %vm244 = vmand %vm242, %vm243
          %245 = vst.msk [vmem:[%s163] sm:$0x3] %vm244, %v240
          %s246 = scalar_lea.vmem %s163, 2 [#allocation5]
          %v247 = vld [vmem:[%s246] sm:$0x3]
          %v250 = vrot.slane %v206, 7
          %v251 = vsel %vm237, %v199, %v250
          %v253 = vmax.f32 %v247, %v251
          %254 = vst.msk [vmem:[%s246] sm:$0x3] %vm244, %v253
        $region36: #{tpu_custom_call.1} parent=23 // pred_fallthru
          _
        // Predicated region
        $region37: #{tpu_custom_call.1} parent=23 // pred_check
          %p255 = pneg %p207
        $region38: #{tpu_custom_call.1} parent=23 // pred_check_branch
          %257 = sbr.rel (%p255) target = $region40
        $region39: #{tpu_custom_call.1} parent=23 // pred_region
          %v258 = vld [vmem:[%s163] sm:$0x3]
          %v259 = vmul.f32 %v258, 0.25
          %v260 = vlaneseq
          %vm261 = vcmp.ge.s32.totalorder %v260, 0
          %vm262 = vcmp.lt.s32.totalorder %v260, 256
          %vm263 = vmand %vm261, %vm262
          %264 = vst.msk [vmem:[%s163] sm:$0x3] %vm263, %v259
        $region40: #{tpu_custom_call.1} parent=23 // pred_fallthru
          _
        %s265 = sand.u32 %s77, 1
        %s266 = scalar_lea.sflag [#allocation4], %s265
        %s267 = sand.u32 %s77, 1
        %s268 = smul.addr %s267, 4
        %s269 = scalar_lea.vmem [#allocation5], %s268
        // Predicated region
        $region41: #{tpu_custom_call.1} parent=23 // pred_check
          %p270 = pneg %p87
        $region42: #{tpu_custom_call.1} parent=23 // pred_check_branch
          %272 = sbr.rel (%p270) target = $region44
        $region43: #{tpu_custom_call.1} parent=23 // pred_region
          %s273 = smul.u32 2, %s24
          %275 = vsyncadd %s266, 0
          %s276 = smul.addr %s23, 4
          %s277 = sadd.s32 %s273, %s276
          %s278 = scalar_lea.hbm %s1, %s277
          %s279 = sshll.u32 %s269, 4
          %s280 = int_to_ptr.vmem [resolvable:$true] %s279
          %s281 = sshll.u32 %s278, 4
          %s282 = int_to_ptr.hbm [resolvable:$true] %s281
          %287 = dma.vmem_to_hbm [thread:$0]  %s280, 64, %s282, %s266, 32, 32, 2
        $region44: #{tpu_custom_call.1} parent=23 // pred_fallthru
          _
      $region24: #{tpu_custom_call.1} parent=5 // pred_fallthru
        _
      %p288 = scmp.le.s32.totalorder 2, %s13
      // Predicated region
      $region45: #{tpu_custom_call.1} parent=5 // pred_check
        %p289 = pneg %p288
      $region46: #{tpu_custom_call.1} parent=5 // pred_check_branch
        %291 = sbr.rel (%p289) target = $region48
      $region47: #{tpu_custom_call.1} parent=5 // pred_region
        %s292 = ssub.s32 %s13, 2
        // Predicated region
        $region49: #{tpu_custom_call.1} parent=47 // pred_check
          %p293 = pneg %p93
        $region50: #{tpu_custom_call.1} parent=47 // pred_check_branch
          %295 = sbr.rel (%p293) target = $region52
        $region51: #{tpu_custom_call.1} parent=47 // pred_region
          %s296 = sand.u32 %s78, 1
          %s297 = scalar_lea.sflag [#allocation4], %s296
          %s298 = sand.u32 %s78, 1
          %s299 = smul.addr %s298, 4
          %s300 = scalar_lea.vmem [#allocation5], %s299
          %302 = dma.done %s297, 64
        $region52: #{tpu_custom_call.1} parent=47 // pred_fallthru
          _
      $region48: #{tpu_custom_call.1} parent=5 // pred_fallthru
        _
    $region6: #{tpu_custom_call.1} parent=1 // loop_footer
      %s17 = sadd.s32 1, %s13
    $region7: #{tpu_custom_call.1} parent=1 // loop_footer_branch
      %12 = sbr.rel target = $region3
    $region8: #{tpu_custom_call.1} parent=1 // loop_exit
      _
    %303 = vsyncpa [#allocation3], 1
    %s304 = scalar_lea.sflag [#allocation3], 1
    %305 = vsyncpa %s304, 1
    %306 = vsyncpa [#allocation4], 1
    %s307 = scalar_lea.sflag [#allocation4], 1
    %308 = vsyncpa %s307, 1

</llo_original>
